<compile_context>
chip_gen: v7x
topology: tpu7x:2x2x1
jax: 0.10.0
libtpu: 0.0.40
codegen_flags: <defaults>
</compile_context>

<pallas_src>
import numpy as np
import jax
import jax.numpy as jnp
from jax.experimental import pallas as pl
from jax.experimental.pallas import tpu as pltpu


# ---------------------------------------------------------------------------
# "__init__": sinusoidal table, identical math to the PyTorch module.
# Built once, kept in float32 (same as the registered torch buffer).
# ---------------------------------------------------------------------------
def make_positional_encoding_table(d_model: int, max_len: int = 5000) -> jnp.ndarray:
    position = np.arange(0, max_len, dtype=np.float32)[:, None]            # (max_len, 1)
    div_term = np.exp(np.arange(0, d_model, 2, dtype=np.float32)
                      * (-np.log(10000.0) / d_model))                      # (ceil(d/2),)
    pe = np.zeros((max_len, d_model), dtype=np.float32)
    pe[:, 0::2] = np.sin(position * div_term)
    pe[:, 1::2] = np.cos(position * div_term[: d_model // 2])              # odd d_model safe
    return jnp.asarray(pe)                                                 # (max_len, d_model)


# ---------------------------------------------------------------------------
# Kernel (shared by both paths).
#   general path: x/o (TS, D) x-dtype, pe (TS, D) f32
#   flat path:    x/o (B, TF) x-dtype, pe (1, TF) f32 (broadcast over sublanes)
# Add is performed in f32 (promotion), cast to the output dtype at the store.
# ---------------------------------------------------------------------------
def _pe_add_kernel(x_ref, pe_ref, o_ref):
    o_ref[...] = (x_ref[...] + pe_ref[...]).astype(o_ref.dtype)


# ---------------------------------------------------------------------------
# Tile-size selection (bandwidth-bound; keep double-buffered blocks in VMEM).
# ---------------------------------------------------------------------------
def _round_up(x: int, m: int) -> int:
    return ((x + m - 1) // m) * m


def _sublane_multiple(dtype) -> int:
    itemsize = jnp.dtype(dtype).itemsize
    return max(8, 32 // max(1, itemsize))   # 8 for f32, 16 for bf16, 32 for int8


def _vmem_budget_and_limit():
    """Generation-aware block budget and explicit scoped-VMEM limit."""
    try:
        cap = int(pltpu.get_tpu_info().vmem_capacity_bytes)
    except Exception:
        cap = 64 * 1024 * 1024               # conservative (v7x-sized) fallback
    if cap >= 128 * 1024 * 1024:             # v5e / v6e: 128 MiB physical VMEM
        budget = 16 * 1024 * 1024            # bigger tiles amortize ~0.35 us/step
    else:                                    # v7x: 64 MiB physical VMEM
        budget = 12 * 1024 * 1024
    # Explicit limit: above v5e's 16-MiB default scoped VMEM, with headroom for
    # Mosaic internal scratch, and always within physical capacity.
    limit = min(cap, 2 * budget + (8 << 20))
    return budget, int(limit)


def _choose_seq_tile(S: int, D: int, x_dtype, budget: int) -> int:
    """Rows per block for the (TS, D) sequence-tiled path."""
    itemsize = jnp.dtype(x_dtype).itemsize
    sub = _sublane_multiple(x_dtype)         # multiple of 8, so pe (f32) is happy too
    # Per grid step, double-buffered: x + out blocks (TS, D) in x dtype, pe block (TS, D) f32.
    per_row = 2 * (2 * D * itemsize + D * 4)
    max_rows = max(sub, budget // per_row)
    ts = min(S, 1024, max_rows)              # 512-1024 rows is the measured sweet spot
    ts = (ts // sub) * sub
    if ts <= 0 or ts >= S:
        return S                             # full dim always satisfies the layout rule
    return ts


def _choose_flat_tile(B: int, F: int, x_dtype, budget: int) -> int:
    """Lane tile for the lane-folded (B, F) path, with sublane-padded accounting."""
    x_item = jnp.dtype(x_dtype).itemsize
    # Physical footprint: rows pad to the dtype sublane multiple (B=2 f32 -> 8 rows;
    # the 1-row f32 pe block -> 8 rows).
    x_rows = _round_up(B, _sublane_multiple(x_dtype))
    pe_rows = _round_up(1, 8)
    # Bytes per lane column, double-buffered: 2 x (x + out) blocks + 2 x pe block.
    per_col = 2 * (2 * x_rows * x_item + pe_rows * 4)
    tf_budget = max(128, (budget // per_col) // 128 * 128)

    if F % 128 == 0:
        return min(tf_budget, F)
    if F < 128:
        return F                             # tiny: one full-dim block (layout-legal)
    # Keep TF a strict multiple of 128 inside the flat extent so only the
    # standard trailing partial block exists (masked vst only on the last tile).
    return min(tf_budget, (F // 128) * 128)


# ---------------------------------------------------------------------------
# Forward
# ---------------------------------------------------------------------------
def positional_encoding_forward(x: jnp.ndarray, pe: jnp.ndarray,
                                *, donate_x: bool = False) -> jnp.ndarray:
    """x: (B, S, D); pe: (max_len, D) float32. Returns x + pe[:S] broadcast over batch."""
    B, S, D = x.shape
    max_len = pe.shape[0]
    assert S <= max_len, "sequence length exceeds positional-encoding table"
    budget, vmem_limit = _vmem_budget_and_limit()
    alias = {0: 0} if donate_x else {}       # optional: reuse x's buffer when donated

    if D % 128 == 0:
        # ------------------- lane-dense D: sequence-tiled path -------------------
        TS = _choose_seq_tile(S, D, x.dtype, budget)
        n_s = pl.cdiv(S, TS)
        if n_s >= B:
            # Batch innermost: pe block index constant across it -> pe DMA'd once
            # per S-tile and reused B times.  Leading (longer) axis splits across
            # v7x's two TensorCores.
            grid = (n_s, B)
            x_spec = pl.BlockSpec((None, TS, D), lambda si, b: (b, si, 0))
            pe_spec = pl.BlockSpec((TS, D), lambda si, b: (si, 0))
            o_spec = pl.BlockSpec((None, TS, D), lambda si, b: (b, si, 0))
        else:
            # Short-S / larger-B: lead with batch so both v7x cores get balanced work.
            grid = (B, n_s)
            x_spec = pl.BlockSpec((None, TS, D), lambda b, si: (b, si, 0))
            pe_spec = pl.BlockSpec((TS, D), lambda b, si: (si, 0))
            o_spec = pl.BlockSpec((None, TS, D), lambda b, si: (b, si, 0))
        return pl.pallas_call(
            _pe_add_kernel,
            out_shape=jax.ShapeDtypeStruct((B, S, D), x.dtype),
            grid=grid,
            in_specs=[x_spec, pe_spec],
            out_specs=o_spec,
            input_output_aliases=alias,
            compiler_params=pltpu.CompilerParams(
                dimension_semantics=("parallel", "parallel"),
                vmem_limit_bytes=vmem_limit,
            ),
        )(x, pe)

    # ---------------- D not a multiple of 128: lane-folded path ----------------
    F = S * D
    TF = _choose_flat_tile(B, F, x.dtype, budget)
    x2 = x.reshape(B, F)                     # row-major reshape: free bitcast
    if TF == F and F % 128 != 0:
        # Tiny case (S*D < 128): a full-dim block is required for layout legality,
        # so pe must have exactly that flat extent (slice cost is negligible here).
        pe2 = pe[:S].reshape(1, F)
    else:
        # Full table flattened (free bitcast); rows selected purely via index_map,
        # no per-call slice / astype dispatch.
        pe2 = pe.reshape(1, max_len * D)

    out2 = pl.pallas_call(
        _pe_add_kernel,
        out_shape=jax.ShapeDtypeStruct((B, F), x.dtype),
        grid=(pl.cdiv(F, TF),),
        in_specs=[
            pl.BlockSpec((B, TF), lambda f: (0, f)),
            pl.BlockSpec((1, TF), lambda f: (0, f)),
        ],
        out_specs=pl.BlockSpec((B, TF), lambda f: (0, f)),
        input_output_aliases=alias,
        compiler_params=pltpu.CompilerParams(
            dimension_semantics=("parallel",),
            vmem_limit_bytes=vmem_limit,
        ),
    )(x2, pe2)
    return out2.reshape(B, S, D)


if __name__ == "__main__":
    key = jax.random.PRNGKey(0)
    k1, k2, k3, k4 = jax.random.split(key, 4)

    # --- Test 1: module-sized small shape (D < 128 -> lane-folded path) ---
    batch, seq_len, d_model = 2, 8, 32
    x = jax.random.normal(k1, (batch, seq_len, d_model), dtype=jnp.float32)
    pe = make_positional_encoding_table(d_model, max_len=64)
    out = jax.block_until_ready(positional_encoding_forward(x, pe))
    ref = x + pe[:seq_len][None, :, :]
    np.testing.assert_allclose(np.asarray(out), np.asarray(ref), rtol=1e-6, atol=1e-6)

    # --- Test 2: general sequence-tiled path (D % 128 == 0) ---
    b2, s2, d2 = 2, 16, 128
    x2 = jax.random.normal(k2, (b2, s2, d2), dtype=jnp.float32)
    pe2 = make_positional_encoding_table(d2, max_len=64)
    out2 = jax.block_until_ready(positional_encoding_forward(x2, pe2))
    ref2 = x2 + pe2[:s2][None, :, :]
    np.testing.assert_allclose(np.asarray(out2), np.asarray(ref2), rtol=1e-6, atol=1e-6)

    # --- Test 3: D >= 128 but not a multiple of 128 -> lane-folded path ---
    b3, s3, d3 = 2, 8, 192
    x3 = jax.random.normal(k3, (b3, s3, d3), dtype=jnp.float32)
    pe3 = make_positional_encoding_table(d3, max_len=64)
    out3 = jax.block_until_ready(positional_encoding_forward(x3, pe3))
    ref3 = x3 + pe3[:s3][None, :, :]
    np.testing.assert_allclose(np.asarray(out3), np.asarray(ref3), rtol=1e-6, atol=1e-6)

    # --- Test 4: bf16 activations; pe stays f32, add in f32, cast at store ---
    b4, s4, d4 = 2, 8, 128
    x4 = jax.random.normal(k4, (b4, s4, d4), dtype=jnp.bfloat16)
    pe4 = make_positional_encoding_table(d4, max_len=64)
    out4 = jax.block_until_ready(positional_encoding_forward(x4, pe4))
    ref4 = (x4.astype(jnp.float32) + pe4[:s4][None, :, :]).astype(jnp.bfloat16)
    np.testing.assert_allclose(np.asarray(out4, dtype=np.float32),
                               np.asarray(ref4, dtype=np.float32), rtol=1e-2, atol=1e-2)

    print("KERNEL_OK")
</pallas_src>

<mosaic_0001>
module attributes {stable_mosaic.version = 11 : i64} {
  func.func @_pe_add_kernel(%arg0: i32, %arg1: memref<2x256xf32, #tpu.memory_space<vmem>>, %arg2: memref<1x256xf32, #tpu.memory_space<vmem>>, %arg3: memref<2x256xf32, #tpu.memory_space<vmem>>) attributes {dimension_semantics = [#tpu.dimension_semantics<parallel>], iteration_bounds = array<i64: 1>, scalar_prefetch = 0 : i64, scratch_operands = 0 : i64, tpu.core_type = #tpu.core_type<tc>, window_params = [{transform_indices = @transform_0, window_bounds = array<i64: 2, 256>}, {transform_indices = @transform_1, window_bounds = array<i64: 1, 256>}, {transform_indices = @transform_2, window_bounds = array<i64: 2, 256>}]} {
    %c0 = arith.constant 0 : index
    %c0_0 = arith.constant 0 : index
    %0 = vector.load %arg1[%c0, %c0_0] : memref<2x256xf32, #tpu.memory_space<vmem>>, vector<2x256xf32>
    %c0_1 = arith.constant 0 : index
    %c0_2 = arith.constant 0 : index
    %1 = vector.load %arg2[%c0_1, %c0_2] : memref<1x256xf32, #tpu.memory_space<vmem>>, vector<1x256xf32>
    %2 = vector.broadcast %1 : vector<1x256xf32> to vector<2x256xf32>
    %3 = arith.addf %0, %2 : vector<2x256xf32>
    %c0_3 = arith.constant 0 : index
    %c0_4 = arith.constant 0 : index
    %4 = vector.load %arg3[%c0_3, %c0_4] : memref<2x256xf32, #tpu.memory_space<vmem>>, vector<2x256xf32>
    tpu.vector_store %arg3[%c0_3, %c0_4], %3 {strides = array<i32>} : memref<2x256xf32, #tpu.memory_space<vmem>>, vector<2x256xf32>,
    return
  }
  func.func @transform_0(%arg0: i32) -> (i32, i32) {
    %c0_i32 = arith.constant 0 : i32
    %c0_i32_0 = arith.constant 0 : i32
    return %c0_i32, %arg0 : i32, i32
  }
  func.func @transform_1(%arg0: i32) -> (i32, i32) {
    %c0_i32 = arith.constant 0 : i32
    %c0_i32_0 = arith.constant 0 : i32
    return %c0_i32, %arg0 : i32, i32
  }
  func.func @transform_2(%arg0: i32) -> (i32, i32) {
    %c0_i32 = arith.constant 0 : i32
    %c0_i32_0 = arith.constant 0 : i32
    return %c0_i32, %arg0 : i32, i32
  }
}

</mosaic_0001>

<llo_original>
// kernel: tpu_custom_call.1
$region0: #{tpu_custom_call.1}
  #allocation0 [shape = 'u32[]', space=smem, size = 0x4, offset = 0x4, fixed_abs, tag = 'smem constant byte address 0x4 - core index']
  #allocation1 [shape = 'u32[144,128]{1,0:T(1,128)}', space=vmem, size = 0x12000, scoped, tag = 'internal scratch']
  %s0 = inlined_call_operand.hbm [shape: f32[2,256], index: 0, kind: input, shape index: {}]
  %s1 = inlined_call_operand.hbm [shape: f32[1,2048], index: 1, kind: input, shape index: {}]
  %s2 = inlined_call_operand.hbm [shape: f32[2,256], index: 2, kind: output, shape index: {}]
  %s3 = sld [smem:[#allocation0]]
  $region26: #{tpu_custom_call.1} parent=0
    _
  %s5 = ssub.s32 1, %s3
  %s6 = scalar_select 0, %s5, %s3
  $region1: #{tpu_custom_call.1} parent=0
    #allocation2 [shape = 'u8[2048]{0}', space=vmem, size = 0x800, scoped, tag = 'input window, operand 0, single buffered']
    #allocation3 [shape = 's32[1]{0}', space=sflag, size = 0x4, scoped, tag = 'scoped memory for tpu_custom_call.1']
    #allocation4 [shape = 's32[1]{0}', space=sflag, size = 0x4, scoped, tag = 'scoped memory for tpu_custom_call.1']
    #allocation5 [shape = 'u8[1024]{0}', space=vmem, size = 0x400, scoped, tag = 'input window, operand 1, single buffered']
    #allocation6 [shape = 's32[1]{0}', space=sflag, size = 0x4, scoped, tag = 'scoped memory for tpu_custom_call.1']
    #allocation7 [shape = 'u8[2048]{0}', space=vmem, size = 0x800, scoped, tag = 'output window, operand 0, single buffered']
    %7 = vsyncpa [#allocation3], 0
    %8 = vsyncpa [#allocation6], 0
    %9 = vsyncpa [#allocation4], 0
    // Predicated region
    $region2: #{tpu_custom_call.1} parent=1 // pred_check
      _
    $region3: #{tpu_custom_call.1} parent=1 // pred_check_branch
      %11 = sbr.rel (0) target = $region5
    $region4: #{tpu_custom_call.1} parent=1 // pred_region
      %s13 = ssub.s32 64, 64
      %14 = vsyncadd [#allocation3], %s13
      %s16 = sshll.u32 [#allocation2], 4
      %s17 = int_to_ptr.vmem [resolvable:$true] %s16
      %19 = dma.hbm_to_vmem [thread:$0]  %s0, 64, %s17, [#allocation3]
    $region5: #{tpu_custom_call.1} parent=1 // pred_fallthru
      _
    // Predicated region
    $region6: #{tpu_custom_call.1} parent=1 // pred_check
      _
    $region7: #{tpu_custom_call.1} parent=1 // pred_check_branch
      %21 = sbr.rel (0) target = $region9
    $region8: #{tpu_custom_call.1} parent=1 // pred_region
      %s23 = ssub.s32 32, 32
      %24 = vsyncadd [#allocation6], %s23
      %s26 = sshll.u32 [#allocation5], 4
      %s27 = int_to_ptr.vmem [resolvable:$true] %s26
      %29 = dma.hbm_to_vmem [thread:$0]  %s1, 32, %s27, [#allocation6]
    $region9: #{tpu_custom_call.1} parent=1 // pred_fallthru
      _
    // Predicated region
    $region10: #{tpu_custom_call.1} parent=1 // pred_check
      _
    $region11: #{tpu_custom_call.1} parent=1 // pred_check_branch
      %31 = sbr.rel (0) target = $region13
    $region12: #{tpu_custom_call.1} parent=1 // pred_region
      %32 = dma.done [#allocation3], 64
    $region13: #{tpu_custom_call.1} parent=1 // pred_fallthru
      _
    // Predicated region
    $region14: #{tpu_custom_call.1} parent=1 // pred_check
      _
    $region15: #{tpu_custom_call.1} parent=1 // pred_check_branch
      %34 = sbr.rel (0) target = $region17
    $region16: #{tpu_custom_call.1} parent=1 // pred_region
      %35 = dma.done [#allocation6], 32
    $region17: #{tpu_custom_call.1} parent=1 // pred_fallthru
      _
    %v36 = vld [vmem:[#allocation2] sm:$0xf]
    %v37 = vld [vmem:[#allocation5] sm:$0x3]
    %v39 = vlaneseq
    %v40 = vshrl.u32 %v39, 7
    %v41 = vsub.s32 0, %v40
    %v42 = vrot.slane %v37, %v41
    %v43 = vlaneseq
    %v44 = vshrl.u32 %v43, 7
    %v45 = vsub.s32 1, %v44
    %v46 = vrot.slane %v37, %v45
    %v47 = vcombine.low %v42, %v46
    %v49 = vunpack.c.l.s4 1983009808
    %v50 = vunpack.c.0.s8 %v49
    %v51 = vlaneseq
    %v52 = vshrl.u32 %v51, 7
    %v53 = vsub.s32 %v50, %v52
    %v54 = vrot.slane %v47, %v53
    %v56 = vadd.f32 %v36, %v54
    %57 = vst [vmem:[#allocation7] sm:$0xf] %v56
    // Predicated region
    $region18: #{tpu_custom_call.1} parent=1 // pred_check
      _
    $region19: #{tpu_custom_call.1} parent=1 // pred_check_branch
      %59 = sbr.rel (0) target = $region21
    $region20: #{tpu_custom_call.1} parent=1 // pred_region
      %s61 = ssub.s32 64, 64
      %62 = vsyncadd [#allocation4], %s61
      %s64 = sshll.u32 [#allocation7], 4
      %s65 = int_to_ptr.vmem [resolvable:$true] %s64
      %67 = dma.vmem_to_hbm [thread:$0]  %s65, 64, %s2, [#allocation4]
    $region21: #{tpu_custom_call.1} parent=1 // pred_fallthru
      _
    // Predicated region
    $region22: #{tpu_custom_call.1} parent=1 // pred_check
      _
    $region23: #{tpu_custom_call.1} parent=1 // pred_check_branch
      %69 = sbr.rel (0) target = $region25
    $region24: #{tpu_custom_call.1} parent=1 // pred_region
      %70 = dma.done [#allocation4], 64
    $region25: #{tpu_custom_call.1} parent=1 // pred_fallthru
      _
    %71 = vsyncpa [#allocation3], 1
    %72 = vsyncpa [#allocation6], 1
    %73 = vsyncpa [#allocation4], 1

</llo_original>
